<compile_context>
chip_gen: v7x
topology: tpu7x:2x2x1
jax: 0.10.0
libtpu: 0.0.40
codegen_flags: <defaults>
</compile_context>

<pallas_src>
from typing import NamedTuple

import jax
import jax.numpy as jnp
from jax import lax
from jax.experimental import pallas as pl
from jax.experimental.pallas import tpu as pltpu

LANE = 128  # TPU lane width. Do NOT raise to 256: kernel is DMA-bound, not MXU-bound.


def _round_up(x: int, m: int) -> int:
    return (x + m - 1) // m * m


def _cdiv(a: int, b: int) -> int:
    return -(-a // b)


# ----------------------------------------------------------------------------
# Kernel: whole 3-layer MLP fused (matmul+bias+tanh, matmul+bias+tanh, matmul+bias).
# ----------------------------------------------------------------------------
def _ode_mlp_kernel(y_ref, w1_ref, b1_ref, w2_ref, b2_ref, w3_ref, b3_ref,
                    out_ref):
    # MXU inputs in the weights' storage dtype (f32 or bf16); accumulation,
    # bias add and tanh in f32 (works on all generations incl. v5e).
    x = y_ref[...].astype(w1_ref.dtype)

    h = jnp.dot(x, w1_ref[...], preferred_element_type=jnp.float32) + b1_ref[...]
    h = jnp.tanh(h)

    h = jnp.dot(h.astype(w2_ref.dtype), w2_ref[...],
                preferred_element_type=jnp.float32) + b2_ref[...]
    h = jnp.tanh(h)

    # `backwards` sign is already folded into W3 / b3 at prepare time.
    g = jnp.dot(h.astype(w3_ref.dtype), w3_ref[...],
                preferred_element_type=jnp.float32) + b3_ref[...]

    out_ref[...] = g.astype(out_ref.dtype)


# ----------------------------------------------------------------------------
# Parameter preparation: do ONCE per trajectory/direction, reuse every eval.
# ----------------------------------------------------------------------------
class PreparedODEFuncParams(NamedTuple):
    w1: jax.Array       # (latent_dim, hidden_pad)      -- un-padded-input path
    w1_pad: jax.Array   # (latent_pad, hidden_pad)      -- lane-padded-input path
    b1: jax.Array       # (1, hidden_pad) f32
    w2: jax.Array       # (hidden_pad, hidden_pad)
    b2: jax.Array       # (1, hidden_pad) f32
    w3: jax.Array       # (hidden_pad, latent_dim)      -- un-padded-output path
    w3_pad: jax.Array   # (hidden_pad, latent_pad)      -- lane-padded-output path
    b3: jax.Array       # (1, latent_dim) f32
    b3_pad: jax.Array   # (1, latent_pad) f32
    latent_dim: int
    latent_pad: int
    hidden_pad: int


def prepare_ode_func_params(params, *, backwards=False,
                            storage_dtype=jnp.float32, lane=LANE):
    """Zero-pad feature dims to the lane width and fold the `backwards` sign
    into the final layer. Padding rows/cols are zero, so the math is exact
    (tanh(0)=0 contributes nothing downstream). Weights are stored in
    `storage_dtype` (f32 or bf16 for halved HBM traffic); biases stay f32."""
    w1, b1, w2, b2, w3, b3 = params
    latent_dim, hidden = w1.shape
    latent_pad = _round_up(latent_dim, lane)
    hidden_pad = _round_up(hidden, lane)
    sign = -1.0 if backwards else 1.0
    f32 = jnp.float32

    w1 = w1.astype(f32)
    w2 = w2.astype(f32)
    w3 = sign * w3.astype(f32)
    b1 = b1.astype(f32)
    b2 = b2.astype(f32)
    b3 = sign * b3.astype(f32)

    w1u = jnp.zeros((latent_dim, hidden_pad), f32).at[:, :hidden].set(w1)
    w1p = jnp.zeros((latent_pad, hidden_pad), f32).at[:latent_dim, :hidden].set(w1)
    b1p = jnp.zeros((1, hidden_pad), f32).at[0, :hidden].set(b1)
    w2p = jnp.zeros((hidden_pad, hidden_pad), f32).at[:hidden, :hidden].set(w2)
    b2p = jnp.zeros((1, hidden_pad), f32).at[0, :hidden].set(b2)
    w3u = jnp.zeros((hidden_pad, latent_dim), f32).at[:hidden, :].set(w3)
    w3p = jnp.zeros((hidden_pad, latent_pad), f32).at[:hidden, :latent_dim].set(w3)
    b3u = b3.reshape(1, latent_dim)
    b3p = jnp.zeros((1, latent_pad), f32).at[0, :latent_dim].set(b3)

    return PreparedODEFuncParams(
        w1=w1u.astype(storage_dtype), w1_pad=w1p.astype(storage_dtype),
        b1=b1p,
        w2=w2p.astype(storage_dtype), b2=b2p,
        w3=w3u.astype(storage_dtype), w3_pad=w3p.astype(storage_dtype),
        b3=b3u, b3_pad=b3p,
        latent_dim=latent_dim, latent_pad=latent_pad, hidden_pad=hidden_pad)


# ----------------------------------------------------------------------------
# Batch tiling: prefer a tile that divides the 8-aligned batch (no y pad copy)
# and gives >=2 grid steps (so v7x megacore shards); fall back to padding.
# ----------------------------------------------------------------------------
def _choose_tiling(batch, bm_max, min_grid_steps):
    batch8 = _round_up(batch, 8)
    n8 = batch8 // 8
    want_steps = min_grid_steps if batch8 >= 8 * min_grid_steps else 1

    best_bm = None
    for d in range(n8, 0, -1):          # largest exact-divisor tile first
        if n8 % d:
            continue
        bm = 8 * d
        if bm > bm_max:
            continue
        if batch8 // bm >= want_steps:
            best_bm = bm
            break
    if best_bm is not None and (best_bm >= 256 or
                                batch8 // best_bm <= max(4 * want_steps, 8)):
        return best_bm, batch8          # exact divisor -> no batch pad copy

    # Fall back: ~want_steps equal tiles (may need a y zero-pad copy).
    bm = min(bm_max, _round_up(_cdiv(batch8, want_steps), 8))
    return bm, _round_up(batch8, bm)


# ----------------------------------------------------------------------------
# Forward wrapper (== ODEFunc.forward). Pass PREPARED params (prepare once).
# ----------------------------------------------------------------------------
def ode_func_forward(t_local, y, prepared: PreparedODEFuncParams, *,
                     bm_max=512, min_grid_steps=2, padded_output=False):
    """Pallas implementation of ODEFunc.forward.

    t_local is accepted for API parity but (as in the PyTorch module) unused by
    the gradient network. The `backwards` sign is chosen at prepare time.
    y may have either latent_dim or latent_pad (lane-padded) feature columns.
    With padded_output=True the result is (batch_pad, latent_pad); entries
    beyond (batch, latent_dim) are undefined and must be ignored by callers.
    """
    del t_local  # gradient_net(y) does not depend on t_local
    p = prepared
    batch, d_in = y.shape

    if d_in == p.latent_dim:
        w1 = p.w1
    elif d_in == p.latent_pad:
        w1 = p.w1_pad
    else:
        raise ValueError(f"y has {d_in} features; expected "
                         f"{p.latent_dim} or {p.latent_pad}")

    if padded_output:
        w3, b3, d_out = p.w3_pad, p.b3_pad, p.latent_pad
    else:
        w3, b3, d_out = p.w3, p.b3, p.latent_dim

    bm, batch_pad = _choose_tiling(batch, bm_max, min_grid_steps)
    if batch_pad != batch:
        y_in = jnp.zeros((batch_pad, d_in), y.dtype).at[:batch].set(y)
    else:
        y_in = y

    grid = (batch_pad // bm,)
    row_map = lambda i: (i, 0)
    const_map = lambda i: (0, 0)  # constant block index -> weights fetched once

    out = pl.pallas_call(
        _ode_mlp_kernel,
        out_shape=jax.ShapeDtypeStruct((batch_pad, d_out), y.dtype),
        grid_spec=pltpu.PrefetchScalarGridSpec(
            num_scalar_prefetch=0,
            grid=grid,
            in_specs=[
                pl.BlockSpec((bm, d_in), row_map),                 # y tile
                pl.BlockSpec((d_in, p.hidden_pad), const_map),     # W1
                pl.BlockSpec((1, p.hidden_pad), const_map),        # b1
                pl.BlockSpec((p.hidden_pad, p.hidden_pad), const_map),  # W2
                pl.BlockSpec((1, p.hidden_pad), const_map),        # b2
                pl.BlockSpec((p.hidden_pad, d_out), const_map),    # W3 (sign folded)
                pl.BlockSpec((1, d_out), const_map),               # b3
            ],
            out_specs=pl.BlockSpec((bm, d_out), row_map),
        ),
        compiler_params=pltpu.CompilerParams(
            dimension_semantics=("parallel",)),
    )(y_in, w1, p.b1, p.w2, p.b2, w3, b3)

    if padded_output:
        return out
    return out if batch_pad == batch else out[:batch]


# ----------------------------------------------------------------------------
# Init mirroring utils.init_network_weights: W ~ N(0, 0.1), b = 0.
# ----------------------------------------------------------------------------
def init_ode_func_params(key, latent_dim, n_units, dtype=jnp.float32):
    k1, k2, k3 = jax.random.split(key, 3)
    std = 0.1
    w1 = (jax.random.normal(k1, (latent_dim, n_units)) * std).astype(dtype)
    b1 = jnp.zeros((n_units,), dtype)
    w2 = (jax.random.normal(k2, (n_units, n_units)) * std).astype(dtype)
    b2 = jnp.zeros((n_units,), dtype)
    w3 = (jax.random.normal(k3, (n_units, latent_dim)) * std).astype(dtype)
    b3 = jnp.zeros((latent_dim,), dtype)
    return (w1, b1, w2, b2, w3, b3)


def _reference_forward(t_local, y, params, backwards=False):
    del t_local
    w1, b1, w2, b2, w3, b3 = params
    h = jnp.tanh(y @ w1 + b1)
    h = jnp.tanh(h @ w2 + b2)
    g = h @ w3 + b3
    return -g if backwards else g


# TODO(synk): the PyTorch module's `self.nsteps += 1` call counter is host-side
# Python state with no tensor semantics; it is intentionally not modeled here.

if __name__ == "__main__":
    key = jax.random.PRNGKey(0)
    k_params, k_y1, k_y2 = jax.random.split(key, 3)

    latent_dim, n_units = 32, 64
    raw_params = init_ode_func_params(k_params, latent_dim, n_units)
    # Prepare ONCE per direction; reused for every evaluation below.
    prep_fwd = prepare_ode_func_params(raw_params, backwards=False)
    prep_bwd = prepare_ode_func_params(raw_params, backwards=True)
    t_local = jnp.float32(0.5)  # unused by gradient_net, kept for API parity

    # --- Case 1: small batch (divides into 2 tiles of 8, no pad copy) --------
    batch = 16
    y = jax.random.normal(k_y1, (batch, latent_dim), dtype=jnp.float32)

    grad = jax.block_until_ready(ode_func_forward(t_local, y, prep_fwd))
    grad_bwd = jax.block_until_ready(ode_func_forward(t_local, y, prep_bwd))
    ref = _reference_forward(t_local, y, raw_params)
    ref_bwd = _reference_forward(t_local, y, raw_params, backwards=True)
    assert grad.shape == (batch, latent_dim)
    assert jnp.allclose(grad, ref, atol=1e-5, rtol=1e-5)
    assert jnp.allclose(grad_bwd, ref_bwd, atol=1e-5, rtol=1e-5)

    # --- Case 2: ragged batch + small tile -> exercises pad fallback path ----
    batch2 = 100
    y2 = jax.random.normal(k_y2, (batch2, latent_dim), dtype=jnp.float32)
    grad2 = jax.block_until_ready(
        ode_func_forward(t_local, y2, prep_fwd, bm_max=32))
    ref2 = _reference_forward(t_local, y2, raw_params)
    assert grad2.shape == (batch2, latent_dim)
    assert jnp.allclose(grad2, ref2, atol=1e-5, rtol=1e-5)

    # --- Case 3: lane-padded output mode (end-to-end padded layout) ----------
    grad_pad = jax.block_until_ready(
        ode_func_forward(t_local, y, prep_fwd, padded_output=True))
    assert grad_pad.shape[1] == prep_fwd.latent_pad
    assert jnp.allclose(grad_pad[:batch, :latent_dim], ref, atol=1e-5, rtol=1e-5)

    # --- Case 4: bf16 weight storage (halved DMA bytes, f32 tanh/bias) -------
    prep_bf16 = prepare_ode_func_params(raw_params, storage_dtype=jnp.bfloat16)
    grad_bf16 = jax.block_until_ready(ode_func_forward(t_local, y, prep_bf16))
    assert jnp.allclose(grad_bf16, ref, atol=5e-2, rtol=5e-2)

    # --- Case 5: amortized dispatch: jitted Euler rollout via lax.scan -------
    dt = jnp.float32(0.05)
    n_steps = 4

    @jax.jit
    def rollout(y0):
        def step(yc, _):
            dy = ode_func_forward(jnp.float32(0.0), yc, prep_fwd)
            return yc + dt * dy, None
        yT, _ = lax.scan(step, y0, None, length=n_steps)
        return yT

    yT = jax.block_until_ready(rollout(y))
    yT_ref = y
    for _ in range(n_steps):
        yT_ref = yT_ref + dt * _reference_forward(t_local, yT_ref, raw_params)
    assert jnp.allclose(yT, yT_ref, atol=1e-4, rtol=1e-4)

    print("KERNEL_OK")
</pallas_src>

<mosaic_0001>
module attributes {stable_mosaic.version = 11 : i64} {
  func.func @_ode_mlp_kernel(%arg0: i32, %arg1: memref<8x32xf32, #tpu.memory_space<vmem>>, %arg2: memref<32x128xf32, #tpu.memory_space<vmem>>, %arg3: memref<1x128xf32, #tpu.memory_space<vmem>>, %arg4: memref<128x128xf32, #tpu.memory_space<vmem>>, %arg5: memref<1x128xf32, #tpu.memory_space<vmem>>, %arg6: memref<128x32xf32, #tpu.memory_space<vmem>>, %arg7: memref<1x32xf32, #tpu.memory_space<vmem>>, %arg8: memref<8x32xf32, #tpu.memory_space<vmem>>) attributes {dimension_semantics = [#tpu.dimension_semantics<parallel>], iteration_bounds = array<i64: 2>, scalar_prefetch = 0 : i64, scratch_operands = 0 : i64, tpu.core_type = #tpu.core_type<tc>, window_params = [{transform_indices = @transform_0, window_bounds = array<i64: 8, 32>}, {pipeline_mode = #tpu.pipeline_mode<synchronous>, transform_indices = @transform_1, window_bounds = array<i64: 32, 128>}, {pipeline_mode = #tpu.pipeline_mode<synchronous>, transform_indices = @transform_2, window_bounds = array<i64: 1, 128>}, {pipeline_mode = #tpu.pipeline_mode<synchronous>, transform_indices = @transform_3, window_bounds = array<i64: 128, 128>}, {pipeline_mode = #tpu.pipeline_mode<synchronous>, transform_indices = @transform_4, window_bounds = array<i64: 1, 128>}, {pipeline_mode = #tpu.pipeline_mode<synchronous>, transform_indices = @transform_5, window_bounds = array<i64: 128, 32>}, {pipeline_mode = #tpu.pipeline_mode<synchronous>, transform_indices = @transform_6, window_bounds = array<i64: 1, 32>}, {transform_indices = @transform_7, window_bounds = array<i64: 8, 32>}]} {
    %c0 = arith.constant 0 : index
    %c0_0 = arith.constant 0 : index
    %0 = vector.load %arg1[%c0, %c0_0] : memref<8x32xf32, #tpu.memory_space<vmem>>, vector<8x32xf32>
    %c0_1 = arith.constant 0 : index
    %c0_2 = arith.constant 0 : index
    %1 = vector.load %arg2[%c0_1, %c0_2] : memref<32x128xf32, #tpu.memory_space<vmem>>, vector<32x128xf32>
    %cst = arith.constant dense<0.000000e+00> : vector<8x128xf32>
    %2 = tpu.matmul %0, %1, %cst {dimension_numbers = #tpu.dot_dimension_numbers<[1], [0], [0], [1], [0, 0, 1, 1], [], []>} : vector<8x32xf32>, vector<32x128xf32>, vector<8x128xf32> -> vector<8x128xf32>
    %c0_3 = arith.constant 0 : index
    %c0_4 = arith.constant 0 : index
    %3 = vector.load %arg3[%c0_3, %c0_4] : memref<1x128xf32, #tpu.memory_space<vmem>>, vector<1x128xf32>
    %4 = vector.broadcast %3 : vector<1x128xf32> to vector<8x128xf32>
    %5 = arith.addf %2, %4 : vector<8x128xf32>
    %6 = math.tanh %5 : vector<8x128xf32>
    %c0_5 = arith.constant 0 : index
    %c0_6 = arith.constant 0 : index
    %7 = vector.load %arg4[%c0_5, %c0_6] : memref<128x128xf32, #tpu.memory_space<vmem>>, vector<128x128xf32>
    %cst_7 = arith.constant dense<0.000000e+00> : vector<8x128xf32>
    %8 = tpu.matmul %6, %7, %cst_7 {dimension_numbers = #tpu.dot_dimension_numbers<[1], [0], [0], [1], [0, 0, 1, 1], [], []>} : vector<8x128xf32>, vector<128x128xf32>, vector<8x128xf32> -> vector<8x128xf32>
    %c0_8 = arith.constant 0 : index
    %c0_9 = arith.constant 0 : index
    %9 = vector.load %arg5[%c0_8, %c0_9] : memref<1x128xf32, #tpu.memory_space<vmem>>, vector<1x128xf32>
    %10 = vector.broadcast %9 : vector<1x128xf32> to vector<8x128xf32>
    %11 = arith.addf %8, %10 : vector<8x128xf32>
    %12 = math.tanh %11 : vector<8x128xf32>
    %c0_10 = arith.constant 0 : index
    %c0_11 = arith.constant 0 : index
    %13 = vector.load %arg6[%c0_10, %c0_11] : memref<128x32xf32, #tpu.memory_space<vmem>>, vector<128x32xf32>
    %cst_12 = arith.constant dense<0.000000e+00> : vector<8x32xf32>
    %14 = tpu.matmul %12, %13, %cst_12 {dimension_numbers = #tpu.dot_dimension_numbers<[1], [0], [0], [1], [0, 0, 1, 1], [], []>} : vector<8x128xf32>, vector<128x32xf32>, vector<8x32xf32> -> vector<8x32xf32>
    %c0_13 = arith.constant 0 : index
    %c0_14 = arith.constant 0 : index
    %15 = vector.load %arg7[%c0_13, %c0_14] : memref<1x32xf32, #tpu.memory_space<vmem>>, vector<1x32xf32>
    %16 = vector.broadcast %15 : vector<1x32xf32> to vector<8x32xf32>
    %17 = arith.addf %14, %16 : vector<8x32xf32>
    %c0_15 = arith.constant 0 : index
    %c0_16 = arith.constant 0 : index
    %18 = vector.load %arg8[%c0_15, %c0_16] : memref<8x32xf32, #tpu.memory_space<vmem>>, vector<8x32xf32>
    tpu.vector_store %arg8[%c0_15, %c0_16], %17 {strides = array<i32>} : memref<8x32xf32, #tpu.memory_space<vmem>>, vector<8x32xf32>,
    return
  }
  func.func @transform_0(%arg0: i32) -> (i32, i32) {
    %c0_i32 = arith.constant 0 : i32
    %c0_i32_0 = arith.constant 0 : i32
    return %arg0, %c0_i32 : i32, i32
  }
  func.func @transform_1(%arg0: i32) -> (i32, i32) {
    %c0_i32 = arith.constant 0 : i32
    %c0_i32_0 = arith.constant 0 : i32
    %c0_i32_1 = arith.constant 0 : i32
    return %c0_i32, %c0_i32_0 : i32, i32
  }
  func.func @transform_2(%arg0: i32) -> (i32, i32) {
    %c0_i32 = arith.constant 0 : i32
    %c0_i32_0 = arith.constant 0 : i32
    %c0_i32_1 = arith.constant 0 : i32
    return %c0_i32, %c0_i32_0 : i32, i32
  }
  func.func @transform_3(%arg0: i32) -> (i32, i32) {
    %c0_i32 = arith.constant 0 : i32
    %c0_i32_0 = arith.constant 0 : i32
    %c0_i32_1 = arith.constant 0 : i32
    return %c0_i32, %c0_i32_0 : i32, i32
  }
  func.func @transform_4(%arg0: i32) -> (i32, i32) {
    %c0_i32 = arith.constant 0 : i32
    %c0_i32_0 = arith.constant 0 : i32
    %c0_i32_1 = arith.constant 0 : i32
    return %c0_i32, %c0_i32_0 : i32, i32
  }
  func.func @transform_5(%arg0: i32) -> (i32, i32) {
    %c0_i32 = arith.constant 0 : i32
    %c0_i32_0 = arith.constant 0 : i32
    %c0_i32_1 = arith.constant 0 : i32
    return %c0_i32, %c0_i32_0 : i32, i32
  }
  func.func @transform_6(%arg0: i32) -> (i32, i32) {
    %c0_i32 = arith.constant 0 : i32
    %c0_i32_0 = arith.constant 0 : i32
    %c0_i32_1 = arith.constant 0 : i32
    return %c0_i32, %c0_i32_0 : i32, i32
  }
  func.func @transform_7(%arg0: i32) -> (i32, i32) {
    %c0_i32 = arith.constant 0 : i32
    %c0_i32_0 = arith.constant 0 : i32
    return %arg0, %c0_i32 : i32, i32
  }
}

</mosaic_0001>

<llo_original>
// kernel: tpu_custom_call.1
$region0: #{tpu_custom_call.1}
  #allocation0 [shape = 'u32[]', space=smem, size = 0x4, offset = 0x4, fixed_abs, tag = 'smem constant byte address 0x4 - core index']
  #allocation1 [shape = 'u32[144,128]{1,0:T(1,128)}', space=vmem, size = 0x12000, scoped, tag = 'internal scratch']
  %s0 = inlined_call_operand.hbm [shape: f32[16,32], index: 0, kind: input, shape index: {}]
  %s1 = inlined_call_operand.vmem [shape: f32[32,128], index: 1, kind: input, shape index: {}]
  %s2 = inlined_call_operand.vmem [shape: f32[1,128], index: 2, kind: input, shape index: {}]
  %s3 = inlined_call_operand.vmem [shape: f32[128,128], index: 3, kind: input, shape index: {}]
  %s4 = inlined_call_operand.vmem [shape: f32[1,128], index: 4, kind: input, shape index: {}]
  %s5 = inlined_call_operand.vmem [shape: f32[128,32], index: 5, kind: input, shape index: {}]
  %s6 = inlined_call_operand.vmem [shape: f32[1,32], index: 6, kind: input, shape index: {}]
  %s7 = inlined_call_operand.hbm [shape: f32[16,32], index: 7, kind: output, shape index: {}]
  %s8 = sld [smem:[#allocation0]]
  $region65: #{tpu_custom_call.1} parent=0
    _
  %s10 = ssub.s32 1, %s8
  %s11 = scalar_select 0, %s10, %s8
  $region1: #{tpu_custom_call.1} parent=0
    #allocation2 [shape = 'u8[8192]{0}', space=vmem, size = 0x2000, scoped, tag = 'input window, operand 0']
    #allocation3 [shape = 's32[2]{0}', space=sflag, size = 0x8, scoped, tag = 'scoped memory for tpu_custom_call.1']
    #allocation4 [shape = 's32[2]{0}', space=sflag, size = 0x8, scoped, tag = 'scoped memory for tpu_custom_call.1']
    #allocation5 [shape = 'u8[8192]{0}', space=vmem, size = 0x2000, scoped, tag = 'output window, operand 0']
    %12 = vsyncpa [#allocation3], 0
    %s13 = scalar_lea.sflag [#allocation3], 1
    %14 = vsyncpa %s13, 0
    %15 = vsyncpa [#allocation4], 0
    %s16 = scalar_lea.sflag [#allocation4], 1
    %17 = vsyncpa %s16, 0
    loop: start=0, step=1, limit=4
    $region2: #{tpu_custom_call.1} parent=1 // loop_pre_header
      _
    $region3: #{tpu_custom_call.1} parent=1 // loop_header
      %s19 = sphi 0, %s23
      %p20 = scmp.ge.s32.totalorder %s19, 4
      %s29 = sphi 0, %s31
      %s32 = sphi 0, %s29
      %s33 = sphi 0, %s32
      %s49 = sphi 0, %s33
      %s53 = sphi 0, %s53
      %s55 = sphi 0, %s53
      %s56 = sphi 0, %s55
      %s70 = sphi 0, %s56
      %s74 = sphi 0, %s74
      %s76 = sphi 0, %s74
      %s77 = sphi 0, %s76
      %s91 = sphi 0, %s77
      %s95 = sphi 0, %s95
      %s97 = sphi 0, %s95
      %s98 = sphi 0, %s97
      %s112 = sphi 0, %s98
      %s116 = sphi 0, %s116
      %s118 = sphi 0, %s116
      %s119 = sphi 0, %s118
      %s133 = sphi 0, %s119
      %s137 = sphi 0, %s137
      %s139 = sphi 0, %s137
      %s140 = sphi 0, %s139
      %s154 = sphi 0, %s140
      %s158 = sphi 0, %s158
      %s160 = sphi 0, %s158
      %s161 = sphi 0, %s160
      %s175 = sphi 0, %s161
      %s181 = sphi 0, %s183
      %s184 = sphi 0, %s181
      %s185 = sphi 0, %s184
      %s201 = sphi 0, %s185
    $region4: #{tpu_custom_call.1} parent=1 // loop_header_branch
      %22 = sbr.rel (%p20) target = $region8
    $region5: #{tpu_custom_call.1} parent=1 // loop_body
      %s24 = ssub.s32 %s19, 1
      %s25 = ssub.s32 %s19, 2
      %s26 = sadd.s32 %s19, 1
      %s27 = ssub.s32 %s19, %s26
      %p28 = scmp.eq.s32.totalorder %s27, 0
      %s30 = sadd.s32 %s29, 1
      %s31 = scalar_select %p28, %s29, %s30
      %p34 = pneg %p28
      %p35 = scmp.eq.s32.totalorder %s19, 1
      %p36 = por %p34, %p35
      %p37 = scmp.ne.s32.totalorder %s29, %s32
      %p38 = scmp.eq.s32.totalorder %s19, 0
      %p39 = por %p37, %p38
      %p40 = scmp.ne.s32.totalorder %s29, %s32
      %p41 = scmp.eq.s32.totalorder %s24, 1
      %p42 = por %p40, %p41
      %p43 = scmp.ne.s32.totalorder %s32, %s33
      %p44 = scmp.eq.s32.totalorder %s24, 0
      %p45 = por %p43, %p44
      %p46 = scmp.ne.s32.totalorder %s32, %s33
      %p47 = scmp.eq.s32.totalorder %s25, 1
      %p48 = por %p46, %p47
      %p50 = scmp.ne.s32.totalorder %s33, %s49
      %p51 = scmp.eq.s32.totalorder %s25, 0
      %p52 = por %p50, %p51
      %s54 = sadd.s32 %s53, 1
      %p57 = scmp.eq.s32.totalorder %s19, 1
      %p58 = scmp.ne.s32.totalorder %s53, %s55
      %p59 = scmp.eq.s32.totalorder %s19, 0
      %p60 = por %p58, %p59
      %p61 = scmp.ne.s32.totalorder %s53, %s55
      %p62 = scmp.eq.s32.totalorder %s24, 1
      %p63 = por %p61, %p62
      %p64 = scmp.ne.s32.totalorder %s55, %s56
      %p65 = scmp.eq.s32.totalorder %s24, 0
      %p66 = por %p64, %p65
      %p67 = scmp.ne.s32.totalorder %s55, %s56
      %p68 = scmp.eq.s32.totalorder %s25, 1
      %p69 = por %p67, %p68
      %p71 = scmp.ne.s32.totalorder %s56, %s70
      %p72 = scmp.eq.s32.totalorder %s25, 0
      %p73 = por %p71, %p72
      %s75 = sadd.s32 %s74, 1
      %p78 = scmp.eq.s32.totalorder %s19, 1
      %p79 = scmp.ne.s32.totalorder %s74, %s76
      %p80 = scmp.eq.s32.totalorder %s19, 0
      %p81 = por %p79, %p80
      %p82 = scmp.ne.s32.totalorder %s74, %s76
      %p83 = scmp.eq.s32.totalorder %s24, 1
      %p84 = por %p82, %p83
      %p85 = scmp.ne.s32.totalorder %s76, %s77
      %p86 = scmp.eq.s32.totalorder %s24, 0
      %p87 = por %p85, %p86
      %p88 = scmp.ne.s32.totalorder %s76, %s77
      %p89 = scmp.eq.s32.totalorder %s25, 1
      %p90 = por %p88, %p89
      %p92 = scmp.ne.s32.totalorder %s77, %s91
      %p93 = scmp.eq.s32.totalorder %s25, 0
      %p94 = por %p92, %p93
      %s96 = sadd.s32 %s95, 1
      %p99 = scmp.eq.s32.totalorder %s19, 1
      %p100 = scmp.ne.s32.totalorder %s95, %s97
      %p101 = scmp.eq.s32.totalorder %s19, 0
      %p102 = por %p100, %p101
      %p103 = scmp.ne.s32.totalorder %s95, %s97
      %p104 = scmp.eq.s32.totalorder %s24, 1
      %p105 = por %p103, %p104
      %p106 = scmp.ne.s32.totalorder %s97, %s98
      %p107 = scmp.eq.s32.totalorder %s24, 0
      %p108 = por %p106, %p107
      %p109 = scmp.ne.s32.totalorder %s97, %s98
      %p110 = scmp.eq.s32.totalorder %s25, 1
      %p111 = por %p109, %p110
      %p113 = scmp.ne.s32.totalorder %s98, %s112
      %p114 = scmp.eq.s32.totalorder %s25, 0
      %p115 = por %p113, %p114
      %s117 = sadd.s32 %s116, 1
      %p120 = scmp.eq.s32.totalorder %s19, 1
      %p121 = scmp.ne.s32.totalorder %s116, %s118
      %p122 = scmp.eq.s32.totalorder %s19, 0
      %p123 = por %p121, %p122
      %p124 = scmp.ne.s32.totalorder %s116, %s118
      %p125 = scmp.eq.s32.totalorder %s24, 1
      %p126 = por %p124, %p125
      %p127 = scmp.ne.s32.totalorder %s118, %s119
      %p128 = scmp.eq.s32.totalorder %s24, 0
      %p129 = por %p127, %p128
      %p130 = scmp.ne.s32.totalorder %s118, %s119
      %p131 = scmp.eq.s32.totalorder %s25, 1
      %p132 = por %p130, %p131
      %p134 = scmp.ne.s32.totalorder %s119, %s133
      %p135 = scmp.eq.s32.totalorder %s25, 0
      %p136 = por %p134, %p135
      %s138 = sadd.s32 %s137, 1
      %p141 = scmp.eq.s32.totalorder %s19, 1
      %p142 = scmp.ne.s32.totalorder %s137, %s139
      %p143 = scmp.eq.s32.totalorder %s19, 0
      %p144 = por %p142, %p143
      %p145 = scmp.ne.s32.totalorder %s137, %s139
      %p146 = scmp.eq.s32.totalorder %s24, 1
      %p147 = por %p145, %p146
      %p148 = scmp.ne.s32.totalorder %s139, %s140
      %p149 = scmp.eq.s32.totalorder %s24, 0
      %p150 = por %p148, %p149
      %p151 = scmp.ne.s32.totalorder %s139, %s140
      %p152 = scmp.eq.s32.totalorder %s25, 1
      %p153 = por %p151, %p152
      %p155 = scmp.ne.s32.totalorder %s140, %s154
      %p156 = scmp.eq.s32.totalorder %s25, 0
      %p157 = por %p155, %p156
      %s159 = sadd.s32 %s158, 1
      %p162 = scmp.eq.s32.totalorder %s19, 1
      %p163 = scmp.ne.s32.totalorder %s158, %s160
      %p164 = scmp.eq.s32.totalorder %s19, 0
      %p165 = por %p163, %p164
      %p166 = scmp.ne.s32.totalorder %s158, %s160
      %p167 = scmp.eq.s32.totalorder %s24, 1
      %p168 = por %p166, %p167
      %p169 = scmp.ne.s32.totalorder %s160, %s161
      %p170 = scmp.eq.s32.totalorder %s24, 0
      %p171 = por %p169, %p170
      %p172 = scmp.ne.s32.totalorder %s160, %s161
      %p173 = scmp.eq.s32.totalorder %s25, 1
      %p174 = por %p172, %p173
      %p176 = scmp.ne.s32.totalorder %s161, %s175
      %p177 = scmp.eq.s32.totalorder %s25, 0
      %p178 = por %p176, %p177
      %s179 = ssub.s32 %s19, %s26
      %p180 = scmp.eq.s32.totalorder %s179, 0
      %s182 = sadd.s32 %s181, 1
      %s183 = scalar_select %p180, %s181, %s182
      %p186 = pneg %p180
      %p187 = scmp.eq.s32.totalorder %s19, 1
      %p188 = por %p186, %p187
      %p189 = scmp.ne.s32.totalorder %s181, %s184
      %p190 = scmp.eq.s32.totalorder %s19, 0
      %p191 = por %p189, %p190
      %p192 = scmp.ne.s32.totalorder %s181, %s184
      %p193 = scmp.eq.s32.totalorder %s24, 1
      %p194 = por %p192, %p193
      %p195 = scmp.ne.s32.totalorder %s184, %s185
      %p196 = scmp.eq.s32.totalorder %s24, 0
      %p197 = por %p195, %p196
      %p198 = scmp.ne.s32.totalorder %s184, %s185
      %p199 = scmp.eq.s32.totalorder %s25, 1
      %p200 = por %p198, %p199
      %p202 = scmp.ne.s32.totalorder %s185, %s201
      %p203 = scmp.eq.s32.totalorder %s25, 0
      %p204 = por %p202, %p203
      %p205 = scmp.le.s32.totalorder 1, %s19
      %p206 = scmp.lt.s32.totalorder %s19, 3
      %p207 = pnand %p205, %p206
      %p208 = pneg %p207
      // Predicated region
      $region9: #{tpu_custom_call.1} parent=5 // pred_check
        _
      $region10: #{tpu_custom_call.1} parent=5 // pred_check_branch
        %210 = sbr.rel (%p207) target = $region12
      $region11: #{tpu_custom_call.1} parent=5 // pred_region
        %s211 = ssub.s32 %s19, 1
        // Predicated region
        $region13: #{tpu_custom_call.1} parent=11 // pred_check
          %p212 = pneg %p66
        $region14: #{tpu_custom_call.1} parent=11 // pred_check_branch
          %214 = sbr.rel (%p212) target = $region16
        $region15: #{tpu_custom_call.1} parent=11 // pred_region
          _
        $region16: #{tpu_custom_call.1} parent=11 // pred_fallthru
          _
        // Predicated region
        $region17: #{tpu_custom_call.1} parent=11 // pred_check
          %p215 = pneg %p87
        $region18: #{tpu_custom_call.1} parent=11 // pred_check_branch
          %217 = sbr.rel (%p215) target = $region20
        $region19: #{tpu_custom_call.1} parent=11 // pred_region
          _
        $region20: #{tpu_custom_call.1} parent=11 // pred_fallthru
          _
        // Predicated region
        $region21: #{tpu_custom_call.1} parent=11 // pred_check
          %p218 = pneg %p108
        $region22: #{tpu_custom_call.1} parent=11 // pred_check_branch
          %220 = sbr.rel (%p218) target = $region24
        $region23: #{tpu_custom_call.1} parent=11 // pred_region
          _
        $region24: #{tpu_custom_call.1} parent=11 // pred_fallthru
          _
        // Predicated region
        $region25: #{tpu_custom_call.1} parent=11 // pred_check
          %p221 = pneg %p129
        $region26: #{tpu_custom_call.1} parent=11 // pred_check_branch
          %223 = sbr.rel (%p221) target = $region28
        $region27: #{tpu_custom_call.1} parent=11 // pred_region
          _
        $region28: #{tpu_custom_call.1} parent=11 // pred_fallthru
          _
        // Predicated region
        $region29: #{tpu_custom_call.1} parent=11 // pred_check
          %p224 = pneg %p150
        $region30: #{tpu_custom_call.1} parent=11 // pred_check_branch
          %226 = sbr.rel (%p224) target = $region32
        $region31: #{tpu_custom_call.1} parent=11 // pred_region
          _
        $region32: #{tpu_custom_call.1} parent=11 // pred_fallthru
          _
        // Predicated region
        $region33: #{tpu_custom_call.1} parent=11 // pred_check
          %p227 = pneg %p171
        $region34: #{tpu_custom_call.1} parent=11 // pred_check_branch
          %229 = sbr.rel (%p227) target = $region36
        $region35: #{tpu_custom_call.1} parent=11 // pred_region
          _
        $region36: #{tpu_custom_call.1} parent=11 // pred_fallthru
          _
      $region12: #{tpu_custom_call.1} parent=5 // pred_fallthru
        _
      %p230 = scmp.lt.s32.totalorder %s19, 2
      // Predicated region
      $region37: #{tpu_custom_call.1} parent=5 // pred_check
        %p231 = pneg %p230
      $region38: #{tpu_custom_call.1} parent=5 // pred_check_branch
        %233 = sbr.rel (%p231) target = $region40
      $region39: #{tpu_custom_call.1} parent=5 // pred_region
        // Predicated region
        $region41: #{tpu_custom_call.1} parent=39 // pred_check
          %p234 = pneg %p39
        $region42: #{tpu_custom_call.1} parent=39 // pred_check_branch
          %236 = sbr.rel (%p234) target = $region44
        $region43: #{tpu_custom_call.1} parent=39 // pred_region
          %s237 = sand.u32 %s29, 1
          %s238 = scalar_lea.sflag [#allocation3], %s237
          %s239 = sand.u32 %s29, 1
          %s240 = smul.addr %s239, 8
          %s241 = scalar_lea.vmem [#allocation2], %s240
          %s243 = ssub.s32 128, 128
          %244 = vsyncadd %s238, %s243
          %s245 = smul.addr %s19, 128
          %s246 = scalar_lea.hbm %s0, %s245
          %s248 = sshll.u32 %s241, 4
          %s249 = int_to_ptr.vmem [resolvable:$true] %s248
          %251 = dma.hbm_to_vmem [thread:$0]  %s246, 128, %s249, %s238
        $region44: #{tpu_custom_call.1} parent=39 // pred_fallthru
          _
      $region40: #{tpu_custom_call.1} parent=5 // pred_fallthru
        _
      %p252 = scmp.le.s32.totalorder 1, %s19
      %p253 = scmp.lt.s32.totalorder %s19, 3
      %p254 = pnand %p252, %p253
      %p255 = pneg %p254
      // Predicated region
      $region45: #{tpu_custom_call.1} parent=5 // pred_check
        _
      $region46: #{tpu_custom_call.1} parent=5 // pred_check_branch
        %257 = sbr.rel (%p254) target = $region48
      $region47: #{tpu_custom_call.1} parent=5 // pred_region
        %s258 = ssub.s32 %s19, 1
        %s259 = sand.u32 %s32, 1
        %s260 = scalar_lea.sflag [#allocation3], %s259
        %s261 = sand.u32 %s32, 1
        %s262 = smul.addr %s261, 8
        %s263 = scalar_lea.vmem [#allocation2], %s262
        // Predicated region
        $region49: #{tpu_custom_call.1} parent=47 // pred_check
          %p264 = pneg %p45
        $region50: #{tpu_custom_call.1} parent=47 // pred_check_branch
          %266 = sbr.rel (%p264) target = $region52
        $region51: #{tpu_custom_call.1} parent=47 // pred_region
          %267 = dma.done %s260, 128
        $region52: #{tpu_custom_call.1} parent=47 // pred_fallthru
          _
        %s268 = sand.u32 %s32, 1
        %s269 = scalar_lea.sflag [#allocation3], %s268
        %s270 = sand.u32 %s32, 1
        %s271 = smul.addr %s270, 8
        %s272 = scalar_lea.vmem [#allocation2], %s271
        %p273 = pneg %p45
        %p274 = pneg %p42
        %p275 = pneg %p66
        %p276 = pneg %p63
        %p277 = pneg %p87
        %p278 = pneg %p84
        %p279 = pneg %p108
        %p280 = pneg %p105
        %p281 = pneg %p129
        %p282 = pneg %p126
        %p283 = pneg %p150
        %p284 = pneg %p147
        %p285 = pneg %p171
        %p286 = pneg %p168
        %p287 = pneg %p197
        %p288 = pneg %p194
        %s289 = sand.u32 %s184, 1
        %s290 = scalar_lea.sflag [#allocation4], %s289
        %s291 = sand.u32 %s184, 1
        %s292 = smul.addr %s291, 8
        %s293 = scalar_lea.vmem [#allocation5], %s292
        %v294 = vld [vmem:[%s263] sm:$0xff]
        %v295 = vld [vmem:[%s1] sm:$0xff]
        %v296 = vld [vmem:[%s1 + $0x8] sm:$0xff]
        %v297 = vld [vmem:[%s1 + $0x10] sm:$0xff]
        %v298 = vld [vmem:[%s1 + $0x18] sm:$0xff]
        %v299 = vld [vmem:[%s2] sm:$0x1]
        %v301 = vlaneseq
        %v302 = vshrl.u32 %v301, 7
        %v303 = vsub.s32 0, %v302
        %v304 = vrot.slane %v299, %v303
        %vm306 = vcmask 261120
        %v308 = vsel %vm306, %v294, 0
        %310 = vmatprep.subr.mxu0 0.0
        %311 = vmatpush1.msra.mxu0 %v295
        %312 = vmatprep.subr.mxu0 0.0
        %313 = vmatpush1.msra.mxu0 %v296
        %314 = vmatprep.subr.mxu0 0.0
        %315 = vmatpush1.msra.mxu0 %v297
        %316 = vmatprep.subr.mxu0 0.0
        %317 = vmatpush1.msra.mxu0 %v298
        %318 = vmatprep.subr.mxu0 0.0
        %319 = vmatpush1.msra.mxu0 0.0
        %320 = vmatprep.subr.mxu0 0.0
        %321 = vmatpush1.msra.mxu0 0.0
        %322 = vmatprep.subr.mxu0 0.0
        %323 = vmatpush1.msra.mxu0 0.0
        %324 = vmatprep.subr.mxu0 0.0
        %325 = vmatpush1.msra.mxu0 0.0
        %326 = vmatprep.subr.mxu0 0.0
        %327 = vmatpush1.msra.mxu0 0.0
        %328 = vmatprep.subr.mxu0 0.0
        %329 = vmatpush1.msra.mxu0 0.0
        %330 = vmatprep.subr.mxu0 0.0
        %331 = vmatpush1.msra.mxu0 0.0
        %332 = vmatprep.subr.mxu0 0.0
        %333 = vmatpush1.msra.mxu0 0.0
        %334 = vmatprep.subr.mxu0 0.0
        %335 = vmatpush1.msra.mxu0 0.0
        %336 = vmatprep.subr.mxu0 0.0
        %337 = vmatpush1.msra.mxu0 0.0
        %338 = vmatprep.subr.mxu0 0.0
        %339 = vmatpush1.msra.mxu0 0.0
        %340 = vmatprep.subr.mxu0 0.0
        %341 = vmatpush1.msra.mxu0 0.0
        %342 = vmatprep.subr.mxu0 0.0
        %343 = vmatpush1.msra.mxu0 0.0
        %344 = vmatprep.subr.mxu0 0.0
        %345 = vmatpush1.msra.mxu0 0.0
        %346 = vmatprep.subr.mxu0 0.0
        %347 = vmatpush1.msra.mxu0 0.0
        %348 = vmatprep.subr.mxu0 0.0
        %349 = vmatpush1.msra.mxu0 0.0
        %350 = vmatprep.subr.mxu0 0.0
        %351 = vmatpush1.msra.mxu0 0.0
        %352 = vmatprep.subr.mxu0 0.0
        %353 = vmatpush1.msra.mxu0 0.0
        %354 = vmatprep.subr.mxu0 0.0
        %355 = vmatpush1.msra.mxu0 0.0
        %356 = vmatprep.subr.mxu0 0.0
        %357 = vmatpush1.msra.mxu0 0.0
        %358 = vmatprep.subr.mxu0 0.0
        %359 = vmatpush1.msra.mxu0 0.0
        %360 = vmatprep.subr.mxu0 0.0
        %361 = vmatpush1.msra.mxu0 0.0
        %362 = vmatprep.subr.mxu0 0.0
        %363 = vmatpush1.msra.mxu0 0.0
        %364 = vmatprep.subr.mxu0 0.0
        %365 = vmatpush1.msra.mxu0 0.0
        %366 = vmatprep.subr.mxu0 0.0
        %367 = vmatpush1.msra.mxu0 0.0
        %368 = vmatprep.subr.mxu0 0.0
        %369 = vmatpush1.msra.mxu0 0.0
        %370 = vmatprep.subr.mxu0 0.0
        %371 = vmatpush1.msra.mxu0 0.0
        %372 = vmatprep.subr.mxu0 0.0
        %373 = vmatpush1.msra.mxu0 0.0
        %374 = vmatprep.mubr.f32.mxu0 0.0
        %375 = vmatmul.mubr.f32.gmra.mrb[0].mxu0 %v308
        %v376 = vpop.f32.mrb[0].mxu0
        %v377 = vadd.f32 %v304, %v376
        %v378 = vpop.f32.mrb[0].mxu0
        %379 = vdwg.mxu0
        %v380 = vtanh.pop %v377
        %v381 = vld [vmem:[%s3] sm:$0xff]
        %v382 = vld [vmem:[%s3 + $0x8] sm:$0xff]
        %v383 = vld [vmem:[%s3 + $0x10] sm:$0xff]
        %v384 = vld [vmem:[%s3 + $0x18] sm:$0xff]
        %v385 = vld [vmem:[%s3 + $0x20] sm:$0xff]
        %v386 = vld [vmem:[%s3 + $0x28] sm:$0xff]
        %v387 = vld [vmem:[%s3 + $0x30] sm:$0xff]
        %v388 = vld [vmem:[%s3 + $0x38] sm:$0xff]
        %v389 = vld [vmem:[%s3 + $0x40] sm:$0xff]
        %v390 = vld [vmem:[%s3 + $0x48] sm:$0xff]
        %v391 = vld [vmem:[%s3 + $0x50] sm:$0xff]
        %v392 = vld [vmem:[%s3 + $0x58] sm:$0xff]
        %v393 = vld [vmem:[%s3 + $0x60] sm:$0xff]
        %v394 = vld [vmem:[%s3 + $0x68] sm:$0xff]
        %v395 = vld [vmem:[%s3 + $0x70] sm:$0xff]
        %v396 = vld [vmem:[%s3 + $0x78] sm:$0xff]
        %v397 = vld [vmem:[%s4] sm:$0x1]
        %v399 = vlaneseq
        %v400 = vshrl.u32 %v399, 7
        %v401 = vsub.s32 0, %v400
        %v402 = vrot.slane %v397, %v401
        %404 = vmatprep.subr.mxu0 0.0
        %405 = vmatpush1.msra.mxu0 %v381
        %406 = vmatprep.subr.mxu0 0.0
        %407 = vmatpush1.msra.mxu0 %v382
        %408 = vmatprep.subr.mxu0 0.0
        %409 = vmatpush1.msra.mxu0 %v383
        %410 = vmatprep.subr.mxu0 0.0
        %411 = vmatpush1.msra.mxu0 %v384
        %412 = vmatprep.subr.mxu0 0.0
        %413 = vmatpush1.msra.mxu0 %v385
        %414 = vmatprep.subr.mxu0 0.0
        %415 = vmatpush1.msra.mxu0 %v386
        %416 = vmatprep.subr.mxu0 0.0
        %417 = vmatpush1.msra.mxu0 %v387
        %418 = vmatprep.subr.mxu0 0.0
        %419 = vmatpush1.msra.mxu0 %v388
        %420 = vmatprep.subr.mxu0 0.0
        %421 = vmatpush1.msra.mxu0 %v389
        %422 = vmatprep.subr.mxu0 0.0
        %423 = vmatpush1.msra.mxu0 %v390
        %424 = vmatprep.subr.mxu0 0.0
        %425 = vmatpush1.msra.mxu0 %v391
        %426 = vmatprep.subr.mxu0 0.0
        %427 = vmatpush1.msra.mxu0 %v392
        %428 = vmatprep.subr.mxu0 0.0
        %429 = vmatpush1.msra.mxu0 %v393
        %430 = vmatprep.subr.mxu0 0.0
        %431 = vmatpush1.msra.mxu0 %v394
        %432 = vmatprep.subr.mxu0 0.0
        %433 = vmatpush1.msra.mxu0 %v395
        %434 = vmatprep.subr.mxu0 0.0
        %435 = vmatpush1.msra.mxu0 %v396
        %436 = vmatprep.subr.mxu0 0.0
        %437 = vmatpush1.msra.mxu0 0.0
        %438 = vmatprep.subr.mxu0 0.0
        %439 = vmatpush1.msra.mxu0 0.0
        %440 = vmatprep.subr.mxu0 0.0
        %441 = vmatpush1.msra.mxu0 0.0
        %442 = vmatprep.subr.mxu0 0.0
        %443 = vmatpush1.msra.mxu0 0.0
        %444 = vmatprep.subr.mxu0 0.0
        %445 = vmatpush1.msra.mxu0 0.0
        %446 = vmatprep.subr.mxu0 0.0
        %447 = vmatpush1.msra.mxu0 0.0
        %448 = vmatprep.subr.mxu0 0.0
        %449 = vmatpush1.msra.mxu0 0.0
        %450 = vmatprep.subr.mxu0 0.0
        %451 = vmatpush1.msra.mxu0 0.0
        %452 = vmatprep.subr.mxu0 0.0
        %453 = vmatpush1.msra.mxu0 0.0
        %454 = vmatprep.subr.mxu0 0.0
        %455 = vmatpush1.msra.mxu0 0.0
        %456 = vmatprep.subr.mxu0 0.0
        %457 = vmatpush1.msra.mxu0 0.0
        %458 = vmatprep.subr.mxu0 0.0
        %459 = vmatpush1.msra.mxu0 0.0
        %460 = vmatprep.subr.mxu0 0.0
        %461 = vmatpush1.msra.mxu0 0.0
        %462 = vmatprep.subr.mxu0 0.0
        %463 = vmatpush1.msra.mxu0 0.0
        %464 = vmatprep.subr.mxu0 0.0
        %465 = vmatpush1.msra.mxu0 0.0
        %466 = vmatprep.subr.mxu0 0.0
        %467 = vmatpush1.msra.mxu0 0.0
        %468 = vmatprep.mubr.f32.mxu0 0.0
        %469 = vmatmul.mubr.f32.gmra.mrb[0].mxu0 %v380
        %v470 = vpop.f32.mrb[0].mxu0
        %v471 = vadd.f32 %v402, %v470
        %v472 = vpop.f32.mrb[0].mxu0
        %473 = vdwg.mxu0
        %v474 = vtanh.pop %v471
        %v475 = vld [vmem:[%s5] sm:$0xff]
        %v476 = vld [vmem:[%s5 + $0x8] sm:$0xff]
        %v477 = vld [vmem:[%s5 + $0x10] sm:$0xff]
        %v478 = vld [vmem:[%s5 + $0x18] sm:$0xff]
        %v479 = vld [vmem:[%s5 + $0x20] sm:$0xff]
        %v480 = vld [vmem:[%s5 + $0x28] sm:$0xff]
        %v481 = vld [vmem:[%s5 + $0x30] sm:$0xff]
        %v482 = vld [vmem:[%s5 + $0x38] sm:$0xff]
        %v483 = vld [vmem:[%s5 + $0x40] sm:$0xff]
        %v484 = vld [vmem:[%s5 + $0x48] sm:$0xff]
        %v485 = vld [vmem:[%s5 + $0x50] sm:$0xff]
        %v486 = vld [vmem:[%s5 + $0x58] sm:$0xff]
        %v487 = vld [vmem:[%s5 + $0x60] sm:$0xff]
        %v488 = vld [vmem:[%s5 + $0x68] sm:$0xff]
        %v489 = vld [vmem:[%s5 + $0x70] sm:$0xff]
        %v490 = vld [vmem:[%s5 + $0x78] sm:$0xff]
        %v491 = vld [vmem:[%s6] sm:$0x1]
        %v493 = vlaneseq
        %v494 = vshrl.u32 %v493, 7
        %v495 = vsub.s32 0, %v494
        %v496 = vrot.slane %v491, %v495
        %498 = vmatprep.subr.mxu0 0.0
        %499 = vmatpush1.msra.mxu0 %v475
        %500 = vmatprep.subr.mxu0 0.0
        %501 = vmatpush1.msra.mxu0 %v476
        %502 = vmatprep.subr.mxu0 0.0
        %503 = vmatpush1.msra.mxu0 %v477
        %504 = vmatprep.subr.mxu0 0.0
        %505 = vmatpush1.msra.mxu0 %v478
        %506 = vmatprep.subr.mxu0 0.0
        %507 = vmatpush1.msra.mxu0 %v479
        %508 = vmatprep.subr.mxu0 0.0
        %509 = vmatpush1.msra.mxu0 %v480
        %510 = vmatprep.subr.mxu0 0.0
        %511 = vmatpush1.msra.mxu0 %v481
        %512 = vmatprep.subr.mxu0 0.0
        %513 = vmatpush1.msra.mxu0 %v482
        %514 = vmatprep.subr.mxu0 0.0
        %515 = vmatpush1.msra.mxu0 %v483
        %516 = vmatprep.subr.mxu0 0.0
        %517 = vmatpush1.msra.mxu0 %v484
        %518 = vmatprep.subr.mxu0 0.0
        %519 = vmatpush1.msra.mxu0 %v485
        %520 = vmatprep.subr.mxu0 0.0
        %521 = vmatpush1.msra.mxu0 %v486
        %522 = vmatprep.subr.mxu0 0.0
        %523 = vmatpush1.msra.mxu0 %v487
        %524 = vmatprep.subr.mxu0 0.0
        %525 = vmatpush1.msra.mxu0 %v488
        %526 = vmatprep.subr.mxu0 0.0
        %527 = vmatpush1.msra.mxu0 %v489
        %528 = vmatprep.subr.mxu0 0.0
        %529 = vmatpush1.msra.mxu0 %v490
        %530 = vmatprep.subr.mxu0 0.0
        %531 = vmatpush1.msra.mxu0 0.0
        %532 = vmatprep.subr.mxu0 0.0
        %533 = vmatpush1.msra.mxu0 0.0
        %534 = vmatprep.subr.mxu0 0.0
        %535 = vmatpush1.msra.mxu0 0.0
        %536 = vmatprep.subr.mxu0 0.0
        %537 = vmatpush1.msra.mxu0 0.0
        %538 = vmatprep.subr.mxu0 0.0
        %539 = vmatpush1.msra.mxu0 0.0
        %540 = vmatprep.subr.mxu0 0.0
        %541 = vmatpush1.msra.mxu0 0.0
        %542 = vmatprep.subr.mxu0 0.0
        %543 = vmatpush1.msra.mxu0 0.0
        %544 = vmatprep.subr.mxu0 0.0
        %545 = vmatpush1.msra.mxu0 0.0
        %546 = vmatprep.subr.mxu0 0.0
        %547 = vmatpush1.msra.mxu0 0.0
        %548 = vmatprep.subr.mxu0 0.0
        %549 = vmatpush1.msra.mxu0 0.0
        %550 = vmatprep.subr.mxu0 0.0
        %551 = vmatpush1.msra.mxu0 0.0
        %552 = vmatprep.subr.mxu0 0.0
        %553 = vmatpush1.msra.mxu0 0.0
        %554 = vmatprep.subr.mxu0 0.0
        %555 = vmatpush1.msra.mxu0 0.0
        %556 = vmatprep.subr.mxu0 0.0
        %557 = vmatpush1.msra.mxu0 0.0
        %558 = vmatprep.subr.mxu0 0.0
        %559 = vmatpush1.msra.mxu0 0.0
        %560 = vmatprep.subr.mxu0 0.0
        %561 = vmatpush1.msra.mxu0 0.0
        %562 = vmatprep.mubr.f32.mxu0 0.0
        %563 = vmatmul.mubr.f32.gmra.mrb[0].mxu0 %v474
        %v564 = vpop.f32.mrb[0].mxu0
        %v565 = vadd.f32 %v496, %v564
        %v566 = vpop.f32.mrb[0].mxu0
        %567 = vdwg.mxu0
        %568 = vst.msk [vmem:[%s293] sm:$0xff] %vm306, %v565
        %s569 = sand.u32 %s184, 1
        %s570 = scalar_lea.sflag [#allocation4], %s569
        %s571 = sand.u32 %s184, 1
        %s572 = smul.addr %s571, 8
        %s573 = scalar_lea.vmem [#allocation5], %s572
        // Predicated region
        $region53: #{tpu_custom_call.1} parent=47 // pred_check
          %p574 = pneg %p194
        $region54: #{tpu_custom_call.1} parent=47 // pred_check_branch
          %576 = sbr.rel (%p574) target = $region56
        $region55: #{tpu_custom_call.1} parent=47 // pred_region
          %s578 = ssub.s32 128, 128
          %579 = vsyncadd %s570, %s578
          %s580 = smul.addr %s24, 128
          %s581 = scalar_lea.hbm %s7, %s580
          %s583 = sshll.u32 %s573, 4
          %s584 = int_to_ptr.vmem [resolvable:$true] %s583
          %586 = dma.vmem_to_hbm [thread:$0]  %s584, 128, %s581, %s570
        $region56: #{tpu_custom_call.1} parent=47 // pred_fallthru
          _
      $region48: #{tpu_custom_call.1} parent=5 // pred_fallthru
        _
      %p587 = scmp.le.s32.totalorder 2, %s19
      // Predicated region
      $region57: #{tpu_custom_call.1} parent=5 // pred_check
        %p588 = pneg %p587
      $region58: #{tpu_custom_call.1} parent=5 // pred_check_branch
        %590 = sbr.rel (%p588) target = $region60
      $region59: #{tpu_custom_call.1} parent=5 // pred_region
        %s591 = ssub.s32 %s19, 2
        // Predicated region
        $region61: #{tpu_custom_call.1} parent=59 // pred_check
          %p592 = pneg %p200
        $region62: #{tpu_custom_call.1} parent=59 // pred_check_branch
          %594 = sbr.rel (%p592) target = $region64
        $region63: #{tpu_custom_call.1} parent=59 // pred_region
          %s595 = sand.u32 %s185, 1
          %s596 = scalar_lea.sflag [#allocation4], %s595
          %s597 = sand.u32 %s185, 1
          %s598 = smul.addr %s597, 8
          %s599 = scalar_lea.vmem [#allocation5], %s598
          %600 = dma.done %s596, 128
        $region64: #{tpu_custom_call.1} parent=59 // pred_fallthru
          _
      $region60: #{tpu_custom_call.1} parent=5 // pred_fallthru
        _
    $region6: #{tpu_custom_call.1} parent=1 // loop_footer
      %s23 = sadd.s32 1, %s19
    $region7: #{tpu_custom_call.1} parent=1 // loop_footer_branch
      %18 = sbr.rel target = $region3
    $region8: #{tpu_custom_call.1} parent=1 // loop_exit
      _
    %601 = vsyncpa [#allocation3], 1
    %s602 = scalar_lea.sflag [#allocation3], 1
    %603 = vsyncpa %s602, 1
    %604 = vsyncpa [#allocation4], 1
    %s605 = scalar_lea.sflag [#allocation4], 1
    %606 = vsyncpa %s605, 1

</llo_original>
